<compile_context>
chip_gen: v7x
topology: tpu7x:2x2x1
jax: 0.10.0
libtpu: 0.0.40
codegen_flags: <defaults>
</compile_context>

<pallas_src>
from functools import partial

import jax
import jax.numpy as jnp
from jax.experimental import pallas as pl
from jax.experimental.pallas import tpu as pltpu


def _layernorm_kernel(x_ref, g_ref, o_ref, *, eps, inv_c):
    # x_ref: (Bt, C, T) tile; g_ref: (1, C, 1) f32 gain; o_ref: (Bt, C, T).
    x = x_ref[...].astype(jnp.float32)                       # compute in f32
    # Single pass over the tile: sum and sum-of-squares together.
    s = jnp.sum(x, axis=1, keepdims=True)                    # (Bt, 1, T)
    ss = jnp.sum(x * x, axis=1, keepdims=True)               # (Bt, 1, T)
    mean = s * inv_c
    var = jnp.maximum(ss * inv_c - mean * mean, 0.0)         # unbiased=False
    inv = jax.lax.rsqrt(var + eps)                           # EUP slot (free)
    o_ref[...] = ((x - mean) * inv * g_ref[...]).astype(o_ref.dtype)


def _vmem_capacity_bytes():
    """Physical VMEM of the local chip; conservative (v7x) fallback."""
    try:
        info = pltpu.get_tpu_info()
        cap = getattr(info, "vmem_capacity_bytes", None)
        if cap:
            return int(cap)
    except Exception:
        pass
    return 64 * 1024 * 1024


def _choose_tiles(B, C, HW_pad, itemsize):
    """Pick (batch_tile, hw_tile, vmem_limit_bytes) for lane-dense streaming."""
    vmem_cap = _vmem_capacity_bytes()
    # Usable budget: stay well under physical VMEM (scoped limit is raised to
    # exactly what we need below).
    vmem_budget = vmem_cap * 3 // 4 - (2 << 20)
    # Per IO byte in the block we need ~4x (double-buffered input + output)
    # plus ~3 live f32 copies of the tile (cast, x*x, normalized result).
    allowed_io = (vmem_budget * itemsize) // (4 * itemsize + 3 * 4)
    # Generation target for the IO block: ~8 MiB on 128 MiB parts (v5e/v6e),
    # ~5 MiB on 64 MiB parts (v7x).
    gen_target = (8 << 20) if vmem_cap >= (100 << 20) else (5 << 20)
    target_io = max(min(gen_target, allowed_io), 128 * C * itemsize)

    # Largest lane-dense (multiple of 128) tile dividing HW_pad within budget.
    bytes_per_lane = max(C * itemsize, 1)
    max_tile = max(128, (target_io // bytes_per_lane) // 128 * 128)
    hw_tile = 128
    t = 128
    limit = min(max_tile, HW_pad)
    while t <= limit:
        if HW_pad % t == 0:
            hw_tile = t
        t += 128

    # If a whole (C, HW_pad) row fits in one tile, pack several batch rows per
    # block to amortize per-step overhead and give the pipeline depth.
    bt = 1
    if hw_tile == HW_pad:
        row_bytes = max(C * HW_pad * itemsize, 1)
        max_bt = max(1, target_io // row_bytes)
        for cand in range(min(B, max_bt), 0, -1):
            if B % cand == 0:
                bt = cand
                break

    # Scoped-VMEM limit for the chosen block.
    block_io = bt * C * hw_tile * itemsize
    block_f32 = bt * C * hw_tile * 4
    vmem_needed = 4 * block_io + 3 * block_f32 + (2 << 20)
    vmem_limit = int(min(max(vmem_needed, 32 << 20), vmem_cap * 3 // 4))
    return bt, hw_tile, vmem_limit


def layer_norm(x, g):
    """x: (B, C, H, W), g: (1, C, 1, 1). Matches the PyTorch LayerNorm module."""
    B, C, H, W = x.shape
    eps = 1e-5 if x.dtype == jnp.float32 else 1e-3
    HW = H * W
    HW_pad = ((HW + 127) // 128) * 128

    x2 = x.reshape(B, C, HW)
    if HW_pad != HW:
        # Pad the lane axis to a multiple of 128: keeps stores unmasked and
        # blocks bounded. Padded lanes compute garbage that is sliced off.
        x2 = jnp.pad(x2, ((0, 0), (0, 0), (0, HW_pad - HW)))
    g2 = g.reshape(1, C, 1).astype(jnp.float32)

    itemsize = jnp.dtype(x.dtype).itemsize
    bt, hw_tile, vmem_limit = _choose_tiles(B, C, HW_pad, itemsize)
    grid = (B // bt, HW_pad // hw_tile)

    out = pl.pallas_call(
        partial(_layernorm_kernel, eps=eps, inv_c=1.0 / C),
        out_shape=jax.ShapeDtypeStruct((B, C, HW_pad), x.dtype),
        grid=grid,
        in_specs=[
            pl.BlockSpec((bt, C, hw_tile), lambda b, s: (b, 0, s)),
            pl.BlockSpec((1, C, 1), lambda b, s: (0, 0, 0)),
        ],
        out_specs=pl.BlockSpec((bt, C, hw_tile), lambda b, s: (b, 0, s)),
        compiler_params=pltpu.CompilerParams(
            dimension_semantics=("parallel", "parallel"),
            vmem_limit_bytes=vmem_limit,
        ),
    )(x2, g2)

    if HW_pad != HW:
        out = out[:, :, :HW]
    return out.reshape(B, C, H, W)


def _reference(x, g):
    eps = 1e-5 if x.dtype == jnp.float32 else 1e-3
    mean = jnp.mean(x, axis=1, keepdims=True)
    var = jnp.mean((x - mean) ** 2, axis=1, keepdims=True)
    return (x - mean) * jax.lax.rsqrt(var + eps) * g


if __name__ == "__main__":
    key = jax.random.PRNGKey(0)

    # Main check: shapes consistent with the module (batch=2, channels=4, 16x16).
    B, C, H, W = 2, 4, 16, 16
    x = jax.random.normal(key, (B, C, H, W), dtype=jnp.float32)
    g = jnp.ones((1, C, 1, 1), dtype=jnp.float32)   # g = ones(1, dim, 1, 1)

    out = layer_norm(x, g)
    out = jax.block_until_ready(out)
    ref = _reference(x, g)
    assert out.shape == (B, C, H, W)
    assert jnp.allclose(out, ref, atol=1e-5, rtol=1e-5)

    # Secondary check: non-multiple-of-128 spatial size exercises the padding path.
    x2 = jax.random.normal(jax.random.PRNGKey(1), (2, 4, 10, 7), dtype=jnp.float32)
    out2 = jax.block_until_ready(layer_norm(x2, g))
    ref2 = _reference(x2, g)
    assert out2.shape == x2.shape
    assert jnp.allclose(out2, ref2, atol=1e-5, rtol=1e-5)

    print("KERNEL_OK")
</pallas_src>

<mosaic_0001>
module attributes {stable_mosaic.version = 11 : i64} {
  func.func @_layernorm_kernel(%arg0: i32, %arg1: i32, %arg2: memref<2x4x256xf32, #tpu.memory_space<vmem>>, %arg3: memref<1x4x1xf32, #tpu.memory_space<vmem>>, %arg4: memref<2x4x256xf32, #tpu.memory_space<vmem>>) attributes {dimension_semantics = [#tpu.dimension_semantics<parallel>, #tpu.dimension_semantics<parallel>], iteration_bounds = array<i64: 1, 1>, scalar_prefetch = 0 : i64, scratch_operands = 0 : i64, tpu.core_type = #tpu.core_type<tc>, window_params = [{transform_indices = @transform_0, window_bounds = array<i64: 2, 4, 256>}, {pipeline_mode = #tpu.pipeline_mode<synchronous>, transform_indices = @transform_1, window_bounds = array<i64: 1, 4, 1>}, {transform_indices = @transform_2, window_bounds = array<i64: 2, 4, 256>}]} {
    %c0 = arith.constant 0 : index
    %c0_0 = arith.constant 0 : index
    %c0_1 = arith.constant 0 : index
    %0 = vector.load %arg2[%c0, %c0_0, %c0_1] : memref<2x4x256xf32, #tpu.memory_space<vmem>>, vector<2x4x256xf32>
    %cst = arith.constant dense<0.000000e+00> : vector<2x256xf32>
    %1 = vector.multi_reduction <add>, %0, %cst [1] : vector<2x4x256xf32> to vector<2x256xf32>
    %2 = vector.shape_cast %1 : vector<2x256xf32> to vector<2x1x256xf32>
    %3 = arith.mulf %0, %0 : vector<2x4x256xf32>
    %cst_2 = arith.constant dense<0.000000e+00> : vector<2x256xf32>
    %4 = vector.multi_reduction <add>, %3, %cst_2 [1] : vector<2x4x256xf32> to vector<2x256xf32>
    %5 = vector.shape_cast %4 : vector<2x256xf32> to vector<2x1x256xf32>
    %cst_3 = arith.constant 2.500000e-01 : f32
    %6 = vector.broadcast %cst_3 : f32 to vector<2x1x256xf32>
    %7 = arith.mulf %2, %6 : vector<2x1x256xf32>
    %cst_4 = arith.constant 2.500000e-01 : f32
    %8 = vector.broadcast %cst_4 : f32 to vector<2x1x256xf32>
    %9 = arith.mulf %5, %8 : vector<2x1x256xf32>
    %10 = arith.mulf %7, %7 : vector<2x1x256xf32>
    %11 = arith.subf %9, %10 : vector<2x1x256xf32>
    %cst_5 = arith.constant 0.000000e+00 : f32
    %12 = vector.broadcast %cst_5 : f32 to vector<2x1x256xf32>
    %13 = arith.maximumf %11, %12 : vector<2x1x256xf32>
    %cst_6 = arith.constant 9.99999974E-6 : f32
    %14 = vector.broadcast %cst_6 : f32 to vector<2x1x256xf32>
    %15 = arith.addf %13, %14 : vector<2x1x256xf32>
    %16 = math.rsqrt %15 : vector<2x1x256xf32>
    %17 = vector.broadcast %7 : vector<2x1x256xf32> to vector<2x4x256xf32>
    %18 = arith.subf %0, %17 : vector<2x4x256xf32>
    %19 = vector.broadcast %16 : vector<2x1x256xf32> to vector<2x4x256xf32>
    %20 = arith.mulf %18, %19 : vector<2x4x256xf32>
    %c0_7 = arith.constant 0 : index
    %c0_8 = arith.constant 0 : index
    %c0_9 = arith.constant 0 : index
    %21 = vector.load %arg3[%c0_7, %c0_8, %c0_9] : memref<1x4x1xf32, #tpu.memory_space<vmem>>, vector<1x4x1xf32>
    %22 = vector.broadcast %21 : vector<1x4x1xf32> to vector<2x4x256xf32>
    %23 = arith.mulf %20, %22 : vector<2x4x256xf32>
    %c0_10 = arith.constant 0 : index
    %c0_11 = arith.constant 0 : index
    %c0_12 = arith.constant 0 : index
    %24 = vector.load %arg4[%c0_10, %c0_11, %c0_12] : memref<2x4x256xf32, #tpu.memory_space<vmem>>, vector<2x4x256xf32>
    tpu.vector_store %arg4[%c0_10, %c0_11, %c0_12], %23 {strides = array<i32>} : memref<2x4x256xf32, #tpu.memory_space<vmem>>, vector<2x4x256xf32>,
    return
  }
  func.func @transform_0(%arg0: i32, %arg1: i32) -> (i32, i32, i32) {
    %c0_i32 = arith.constant 0 : i32
    %c0_i32_0 = arith.constant 0 : i32
    return %arg0, %c0_i32, %arg1 : i32, i32, i32
  }
  func.func @transform_1(%arg0: i32, %arg1: i32) -> (i32, i32, i32) {
    %c0_i32 = arith.constant 0 : i32
    %c0_i32_0 = arith.constant 0 : i32
    %c0_i32_1 = arith.constant 0 : i32
    %c0_i32_2 = arith.constant 0 : i32
    return %c0_i32, %c0_i32_0, %c0_i32_1 : i32, i32, i32
  }
  func.func @transform_2(%arg0: i32, %arg1: i32) -> (i32, i32, i32) {
    %c0_i32 = arith.constant 0 : i32
    %c0_i32_0 = arith.constant 0 : i32
    return %arg0, %c0_i32, %arg1 : i32, i32, i32
  }
}

</mosaic_0001>

<llo_original>
// kernel: tpu_custom_call.1
$region0: #{tpu_custom_call.1}
  #allocation0 [shape = 'u32[]', space=smem, size = 0x4, offset = 0x4, fixed_abs, tag = 'smem constant byte address 0x4 - core index']
  #allocation1 [shape = 'u32[144,128]{1,0:T(1,128)}', space=vmem, size = 0x12000, scoped, tag = 'internal scratch']
  %s0 = inlined_call_operand.hbm [shape: f32[2,4,256], index: 0, kind: input, shape index: {}]
  %s1 = inlined_call_operand.vmem [shape: f32[1,4,1], index: 1, kind: input, shape index: {}]
  %s2 = inlined_call_operand.hbm [shape: f32[2,4,256], index: 2, kind: output, shape index: {}]
  %s3 = sld [smem:[#allocation0]]
  $region22: #{tpu_custom_call.1} parent=0
    _
  %s5 = ssub.s32 1, %s3
  %s6 = scalar_select 0, %s5, %s3
  $region1: #{tpu_custom_call.1} parent=0
    #allocation2 [shape = 'u8[8192]{0}', space=vmem, size = 0x2000, scoped, tag = 'input window, operand 0, single buffered']
    #allocation3 [shape = 's32[1]{0}', space=sflag, size = 0x4, scoped, tag = 'scoped memory for tpu_custom_call.1']
    #allocation4 [shape = 's32[1]{0}', space=sflag, size = 0x4, scoped, tag = 'scoped memory for tpu_custom_call.1']
    #allocation5 [shape = 'u8[8192]{0}', space=vmem, size = 0x2000, scoped, tag = 'output window, operand 0, single buffered']
    %7 = vsyncpa [#allocation3], 0
    %8 = vsyncpa [#allocation4], 0
    // Predicated region
    $region2: #{tpu_custom_call.1} parent=1 // pred_check
      _
    $region3: #{tpu_custom_call.1} parent=1 // pred_check_branch
      %10 = sbr.rel (0) target = $region5
    $region4: #{tpu_custom_call.1} parent=1 // pred_region
      %s12 = ssub.s32 256, 256
      %13 = vsyncadd [#allocation3], %s12
      %s14 = sshll.u32 [#allocation2], 4
      %s15 = int_to_ptr.vmem [resolvable:$true] %s14
      %20 = dma.hbm_to_vmem [thread:$0]  %s0, 256, %s15, [#allocation3], 128, 128, 8
    $region5: #{tpu_custom_call.1} parent=1 // pred_fallthru
      _
    // Predicated region
    $region6: #{tpu_custom_call.1} parent=1 // pred_check
      _
    $region7: #{tpu_custom_call.1} parent=1 // pred_check_branch
      %22 = sbr.rel (0) target = $region9
    $region8: #{tpu_custom_call.1} parent=1 // pred_region
      _
    $region9: #{tpu_custom_call.1} parent=1 // pred_fallthru
      _
    // Predicated region
    $region10: #{tpu_custom_call.1} parent=1 // pred_check
      _
    $region11: #{tpu_custom_call.1} parent=1 // pred_check_branch
      %24 = sbr.rel (0) target = $region13
    $region12: #{tpu_custom_call.1} parent=1 // pred_region
      %25 = dma.done [#allocation3], 256
    $region13: #{tpu_custom_call.1} parent=1 // pred_fallthru
      _
    %v26 = vld [vmem:[#allocation2] sm:$0xff]
    %v27 = vld [vmem:[#allocation2 + $0x8] sm:$0xff]
    %v30 = vcombine.high %v26, %v26
    %v31 = vcombine.high %v27, %v27
    %vm34 = vcmask 1043456
    %v35 = vsel %vm34, %v26, 0.0
    %v36 = vrot.slane %v35, 4
    %v37 = vadd.f32 %v35, %v36
    %v38 = vrot.slane %v37, 2
    %v39 = vadd.f32 %v37, %v38
    %v40 = vrot.slane %v39, 1
    %v41 = vadd.f32 %v39, %v40
    %v42 = vsel %vm34, %v30, 0.0
    %v43 = vrot.slane %v42, 4
    %v44 = vadd.f32 %v42, %v43
    %v45 = vrot.slane %v44, 2
    %v46 = vadd.f32 %v44, %v45
    %v47 = vrot.slane %v46, 1
    %v48 = vadd.f32 %v46, %v47
    %v49 = vsel %vm34, %v27, 0.0
    %v50 = vrot.slane %v49, 4
    %v51 = vadd.f32 %v49, %v50
    %v52 = vrot.slane %v51, 2
    %v53 = vadd.f32 %v51, %v52
    %v54 = vrot.slane %v53, 1
    %v55 = vadd.f32 %v53, %v54
    %v56 = vsel %vm34, %v31, 0.0
    %v57 = vrot.slane %v56, 4
    %v58 = vadd.f32 %v56, %v57
    %v59 = vrot.slane %v58, 2
    %v60 = vadd.f32 %v58, %v59
    %v61 = vrot.slane %v60, 1
    %v62 = vadd.f32 %v60, %v61
    %v63 = vmul.f32 %v26, %v26
    %v64 = vmul.f32 %v27, %v27
    %v67 = vcombine.high %v63, %v63
    %v68 = vcombine.high %v64, %v64
    %v71 = vsel %vm34, %v63, 0.0
    %v72 = vrot.slane %v71, 4
    %v73 = vadd.f32 %v71, %v72
    %v74 = vrot.slane %v73, 2
    %v75 = vadd.f32 %v73, %v74
    %v76 = vrot.slane %v75, 1
    %v77 = vadd.f32 %v75, %v76
    %v78 = vsel %vm34, %v67, 0.0
    %v79 = vrot.slane %v78, 4
    %v80 = vadd.f32 %v78, %v79
    %v81 = vrot.slane %v80, 2
    %v82 = vadd.f32 %v80, %v81
    %v83 = vrot.slane %v82, 1
    %v84 = vadd.f32 %v82, %v83
    %v85 = vsel %vm34, %v64, 0.0
    %v86 = vrot.slane %v85, 4
    %v87 = vadd.f32 %v85, %v86
    %v88 = vrot.slane %v87, 2
    %v89 = vadd.f32 %v87, %v88
    %v90 = vrot.slane %v89, 1
    %v91 = vadd.f32 %v89, %v90
    %v92 = vsel %vm34, %v68, 0.0
    %v93 = vrot.slane %v92, 4
    %v94 = vadd.f32 %v92, %v93
    %v95 = vrot.slane %v94, 2
    %v96 = vadd.f32 %v94, %v95
    %v97 = vrot.slane %v96, 1
    %v98 = vadd.f32 %v96, %v97
    %v99 = vmul.f32 %v41, 0.25
    %v100 = vmul.f32 %v48, 0.25
    %v101 = vmul.f32 %v55, 0.25
    %v102 = vmul.f32 %v62, 0.25
    %v103 = vmul.f32 %v77, 0.25
    %v104 = vmul.f32 %v84, 0.25
    %v105 = vmul.f32 %v91, 0.25
    %v106 = vmul.f32 %v98, 0.25
    %v107 = vmul.f32 %v99, %v99
    %v108 = vmul.f32 %v100, %v100
    %v109 = vmul.f32 %v101, %v101
    %v110 = vmul.f32 %v102, %v102
    %v111 = vsub.f32 %v103, %v107
    %v112 = vsub.f32 %v104, %v108
    %v113 = vsub.f32 %v105, %v109
    %v114 = vsub.f32 %v106, %v110
    %v115 = vmax.f32 %v111, 0.0
    %v116 = vmax.f32 %v112, 0.0
    %v117 = vmax.f32 %v113, 0.0
    %v118 = vmax.f32 %v114, 0.0
    %v119 = vadd.f32 %v115, 1e-05
    %v120 = vadd.f32 %v116, 1e-05
    %v121 = vadd.f32 %v117, 1e-05
    %v122 = vadd.f32 %v118, 1e-05
    %v123 = vrsqrt.pop %v119
    %v124 = vrsqrt.pop %v120
    %v125 = vrsqrt.pop %v121
    %v126 = vrsqrt.pop %v122
    %v131 = vcombine.low %v99, %v100
    %v132 = vcombine.low %v101, %v102
    %v135 = vsub.f32 %v26, %v131
    %v136 = vsub.f32 %v27, %v132
    %v141 = vcombine.low %v123, %v124
    %v142 = vcombine.low %v125, %v126
    %v145 = vmul.f32 %v135, %v141
    %v146 = vmul.f32 %v136, %v142
    %v147 = vld [vmem:[%s1] sm:$0xf]
    %149 = vset.pattern.permute.xlu0 0
    %150 = vperm.xlu0 %149, %v147
    %v151 = vpop.permute.xlu0 %150
    %v153 = vunpack.c.l.s4 839922192
    %v154 = vunpack.c.0.s8 %v153
    %v155 = vlaneseq
    %v156 = vshrl.u32 %v155, 7
    %v157 = vsub.s32 %v154, %v156
    %v158 = vrot.slane %v151, %v157
    %v160 = vmul.f32 %v145, %v158
    %v161 = vmul.f32 %v146, %v158
    %162 = vst [vmem:[#allocation5] sm:$0xff] %v160
    %163 = vst [vmem:[#allocation5 + $0x8] sm:$0xff] %v161
    // Predicated region
    $region14: #{tpu_custom_call.1} parent=1 // pred_check
      _
    $region15: #{tpu_custom_call.1} parent=1 // pred_check_branch
      %165 = sbr.rel (0) target = $region17
    $region16: #{tpu_custom_call.1} parent=1 // pred_region
      %s167 = ssub.s32 256, 256
      %168 = vsyncadd [#allocation4], %s167
      %s169 = sshll.u32 [#allocation5], 4
      %s170 = int_to_ptr.vmem [resolvable:$true] %s169
      %175 = dma.vmem_to_hbm [thread:$0]  %s170, 256, %s2, [#allocation4], 128, 128, 8
    $region17: #{tpu_custom_call.1} parent=1 // pred_fallthru
      _
    // Predicated region
    $region18: #{tpu_custom_call.1} parent=1 // pred_check
      _
    $region19: #{tpu_custom_call.1} parent=1 // pred_check_branch
      %177 = sbr.rel (0) target = $region21
    $region20: #{tpu_custom_call.1} parent=1 // pred_region
      %178 = dma.done [#allocation4], 256
    $region21: #{tpu_custom_call.1} parent=1 // pred_fallthru
      _
    %179 = vsyncpa [#allocation3], 1
    %180 = vsyncpa [#allocation4], 1

</llo_original>
